<compile_context>
chip_gen: v5e
topology: v5e:2x2
jax: 0.10.0
libtpu: 0.0.40
codegen_flags: <defaults>
</compile_context>

<pallas_src>
import jax
import jax.numpy as jnp
from jax.experimental import pallas as pl
from jax.experimental.pallas import tpu as pltpu

LANE = 128       # lane width (fixed by hardware)
BM_MAX = 4096    # rows per grid step; 4096*128*4B = 2 MiB per f32 input block


def _tensorcores_per_device() -> int:
    """Best-effort TensorCore count of the default device.

    1 on v2/v3 (per-device), v5e, v6e; 2 on v4/v5p (megacore) and v7x.
    Falls back to 2 (harmless on single-core chips: only a duplicate
    accumulator init/finalize, no extra DMA).
    """
    try:
        dev = jax.devices()[0]
        n = getattr(dev, "num_cores", None)
        if isinstance(n, int) and n in (1, 2):
            return n
        kind = str(getattr(dev, "device_kind", "")).lower()
        if any(m in kind for m in ("lite", "v5e", "v6e", "v2", "v3")):
            return 1
        return 2
    except Exception:
        return 2


def _make_kernel(eps2: float, BM: int, nblocks: int, nb2: int,
                 valid_rows_last: int):
    needs_row_mask = valid_rows_last != BM   # only the final block is partial

    def kernel(x_ref, y_ref, out_ref, acc_ref):
        p = pl.program_id(0)   # core half ("parallel")
        i = pl.program_id(1)   # reduction step within the half ("arbitrary")
        v = p * nb2 + i        # virtual block index into the row-tiled input

        @pl.when(i == 0)
        def _init():
            acc_ref[...] = jnp.zeros_like(acc_ref)

        def charb():
            x = x_ref[...].astype(jnp.float32)
            y = y_ref[...].astype(jnp.float32)
            d = x - y
            return jnp.sqrt(d * d + eps2)

        if needs_row_mask:
            # Steady state: pure elementwise accumulate, no mask ops.
            @pl.when(v < nblocks - 1)
            def _acc_full():
                acc_ref[...] += charb()

            # Only the final (row-partial) block pays for the mask.  Block-local
            # row index -> one iota + one compare + one select.
            @pl.when(v == nblocks - 1)
            def _acc_masked():
                row_id = jax.lax.broadcasted_iota(jnp.int32, (BM, LANE), 0)
                acc_ref[...] += jnp.where(row_id < valid_rows_last,
                                          charb(), jnp.float32(0.0))
        else:
            # (v < nblocks) skips the dummy overflow step when nblocks is odd
            # and the grid is split 2-way; its DMA is elided via the index clamp.
            @pl.when(v < nblocks)
            def _acc_full():
                acc_ref[...] += charb()

        @pl.when(i == nb2 - 1)
        def _finalize():
            # Single cross-lane reduce + SMEM scalar write per core half.
            out_ref[0, 0] = jnp.sum(acc_ref[...])

    return kernel


def charbonnier_loss(output, target, eps: float = 1e-3,
                     reduction: str = "mean", block_rows: int | None = None):
    """Charbonnier loss: reduce(sqrt((output-target)^2 + eps^2)).

    `block_rows` optionally caps the per-step row tile (testing / sweeping).
    """
    if reduction not in ("mean", "sum"):
        raise ValueError("Reduction type not supported")
    assert output.shape == target.shape

    total = int(output.size)
    eps2 = float(eps) * float(eps)

    # Keep native dtype on the wire (bf16 stays bf16); cast happens in-kernel.
    x = output.reshape(-1)
    y = target.reshape(-1)

    rows = total // LANE          # full 128-wide rows
    tail = total - rows * LANE    # 0..127 ragged elements

    pieces = []

    if tail:
        # <128-element ragged tail reduced with plain jnp: avoids the old
        # full-array jnp.pad (which tripled HBM traffic on ragged shapes).
        tx = x[rows * LANE:].astype(jnp.float32)
        ty = y[rows * LANE:].astype(jnp.float32)
        td = tx - ty
        pieces.append(jnp.sum(jnp.sqrt(td * td + eps2)))

    if rows:
        xm = x[: rows * LANE] if tail else x
        ym = y[: rows * LANE] if tail else y
        x2 = xm.reshape(rows, LANE)   # contiguous reshape: free
        y2 = ym.reshape(rows, LANE)

        bm_cap = BM_MAX if block_rows is None else int(block_rows)
        BM = rows if rows <= bm_cap else bm_cap
        nblocks = pl.cdiv(rows, BM)
        valid_rows_last = rows - (nblocks - 1) * BM   # rows in final block

        # 2-way split only when the chip actually has two TensorCores and
        # there is more than one block to split.
        num_splits = _tensorcores_per_device() if nblocks >= 2 else 1
        nb2 = pl.cdiv(nblocks, num_splits)            # blocks per core half

        kernel = _make_kernel(eps2, BM, nblocks, nb2, valid_rows_last)

        def in_map(p, i):
            # The dummy overflow step (odd nblocks) clamps to the immediately
            # preceding block of the same half -> same block index as the
            # previous step, so Pallas skips the DMA for it entirely.
            return (jnp.minimum(p * nb2 + i, nblocks - 1), 0)

        partials = pl.pallas_call(
            kernel,
            out_shape=jax.ShapeDtypeStruct((num_splits, 1), jnp.float32),
            grid_spec=pltpu.PrefetchScalarGridSpec(
                num_scalar_prefetch=0,
                grid=(num_splits, nb2),
                in_specs=[
                    pl.BlockSpec((BM, LANE), in_map),
                    pl.BlockSpec((BM, LANE), in_map),
                ],
                out_specs=pl.BlockSpec((1, 1), lambda p, i: (p, 0),
                                       memory_space=pltpu.SMEM),
                scratch_shapes=[pltpu.VMEM((BM, LANE), jnp.float32)],
            ),
            compiler_params=pltpu.CompilerParams(
                dimension_semantics=("parallel", "arbitrary"),
            ),
        )(x2, y2)
        pieces.append(jnp.sum(partials))

    # TODO(synk): optional plain-jnp fast path for tiny inputs (rows <= ~256)
    # where pallas_call launch overhead dominates; omitted so the kernel is
    # always exercised here.
    total_sum = pieces[0] if len(pieces) == 1 else pieces[0] + pieces[1]
    if reduction == "mean":
        return total_sum / total
    return total_sum


if __name__ == "__main__":
    key = jax.random.PRNGKey(0)
    k1, k2, k3, k4, k5, k6 = jax.random.split(key, 6)
    eps = 1e-3
    eps2 = eps * eps

    # 1) Small NCHW inputs (lane-aligned: 2*4*16*16 = 2048 elements).
    shape = (2, 4, 16, 16)
    output = jax.random.normal(k1, shape, dtype=jnp.float32)
    target = jax.random.normal(k2, shape, dtype=jnp.float32)

    loss_mean = charbonnier_loss(output, target, eps=eps, reduction="mean")
    loss_sum = charbonnier_loss(output, target, eps=eps, reduction="sum")
    jax.block_until_ready(loss_mean)
    jax.block_until_ready(loss_sum)

    diff = output - target
    ref = jnp.sqrt(diff * diff + eps2)
    assert jnp.allclose(loss_mean, jnp.mean(ref), rtol=1e-5, atol=1e-6), (
        loss_mean, jnp.mean(ref))
    assert jnp.allclose(loss_sum, jnp.sum(ref), rtol=1e-5, atol=1e-4), (
        loss_sum, jnp.sum(ref))

    # 2) Ragged (non-multiple-of-128) case exercises the jnp tail path.
    shape2 = (3, 5, 7, 9)   # 945 elements -> 7 full rows + 49 tail
    o2 = jax.random.normal(k3, shape2, dtype=jnp.float32)
    t2 = jax.random.normal(k4, shape2, dtype=jnp.float32)
    lm2 = charbonnier_loss(o2, t2, eps=eps, reduction="mean")
    jax.block_until_ready(lm2)
    d2 = o2 - t2
    ref2 = jnp.mean(jnp.sqrt(d2 * d2 + eps2))
    assert jnp.allclose(lm2, ref2, rtol=1e-5, atol=1e-6), (lm2, ref2)

    # 3) bf16 + forced small block: exercises multi-block grid, the gated
    #    final-block row mask, the (possible) 2-way core split, the dummy
    #    overflow step, and the in-kernel f32 cast.
    shape3 = (3, 37, 41)    # 4551 elements -> 35 rows (+71 tail), 5 blocks of 8
    o3 = jax.random.normal(k5, shape3, dtype=jnp.bfloat16)
    t3 = jax.random.normal(k6, shape3, dtype=jnp.bfloat16)
    lm3 = charbonnier_loss(o3, t3, eps=eps, reduction="mean", block_rows=8)
    ls3 = charbonnier_loss(o3, t3, eps=eps, reduction="sum", block_rows=8)
    jax.block_until_ready(lm3)
    jax.block_until_ready(ls3)
    d3 = o3.astype(jnp.float32) - t3.astype(jnp.float32)
    ref3 = jnp.sqrt(d3 * d3 + eps2)
    assert jnp.allclose(lm3, jnp.mean(ref3), rtol=1e-5, atol=1e-5), (
        lm3, jnp.mean(ref3))
    assert jnp.allclose(ls3, jnp.sum(ref3), rtol=1e-5, atol=1e-3), (
        ls3, jnp.sum(ref3))

    print("KERNEL_OK")
</pallas_src>

<mosaic_0001>
module attributes {stable_mosaic.version = 11 : i64} {
  func.func @kernel(%arg0: i32, %arg1: i32, %arg2: memref<16x128xf32, #tpu.memory_space<vmem>>, %arg3: memref<16x128xf32, #tpu.memory_space<vmem>>, %arg4: memref<1x1xf32, #tpu.memory_space<smem>>, %arg5: memref<16x128xf32, #tpu.memory_space<vmem>>) attributes {dimension_semantics = [#tpu.dimension_semantics<parallel>, #tpu.dimension_semantics<arbitrary>], iteration_bounds = array<i64: 1, 1>, scalar_prefetch = 0 : i64, scratch_operands = 1 : i64, tpu.core_type = #tpu.core_type<tc>, window_params = [{transform_indices = @transform_0, window_bounds = array<i64: 16, 128>}, {transform_indices = @transform_1, window_bounds = array<i64: 16, 128>}, {transform_indices = @transform_2, window_bounds = array<i64: 1, 1>}]} {
    %c1_i32 = arith.constant 1 : i32
    %0 = arith.muli %arg0, %c1_i32 : i32
    %1 = arith.addi %0, %arg1 : i32
    %c0_i32 = arith.constant 0 : i32
    %2 = arith.cmpi eq, %arg1, %c0_i32 : i32
    %3 = arith.extui %2 : i1 to i32
    %c0_i32_0 = arith.constant 0 : i32
    %4 = arith.cmpi ne, %3, %c0_i32_0 : i32
    scf.if %4 {
      %cst = arith.constant 0.000000e+00 : f32
      %11 = vector.broadcast %cst : f32 to vector<16x128xf32>
      %c0 = arith.constant 0 : index
      %c0_5 = arith.constant 0 : index
      %12 = vector.load %arg5[%c0, %c0_5] : memref<16x128xf32, #tpu.memory_space<vmem>>, vector<16x128xf32>
      tpu.vector_store %arg5[%c0, %c0_5], %11 {strides = array<i32>} : memref<16x128xf32, #tpu.memory_space<vmem>>, vector<16x128xf32>,
    } else {
    }
    %c1_i32_1 = arith.constant 1 : i32
    %5 = arith.cmpi slt, %1, %c1_i32_1 : i32
    %6 = arith.extui %5 : i1 to i32
    %c0_i32_2 = arith.constant 0 : i32
    %7 = arith.cmpi ne, %6, %c0_i32_2 : i32
    scf.if %7 {
      %c0 = arith.constant 0 : index
      %c0_5 = arith.constant 0 : index
      %11 = vector.load %arg5[%c0, %c0_5] : memref<16x128xf32, #tpu.memory_space<vmem>>, vector<16x128xf32>
      %c0_6 = arith.constant 0 : index
      %c0_7 = arith.constant 0 : index
      %12 = vector.load %arg2[%c0_6, %c0_7] : memref<16x128xf32, #tpu.memory_space<vmem>>, vector<16x128xf32>
      %c0_8 = arith.constant 0 : index
      %c0_9 = arith.constant 0 : index
      %13 = vector.load %arg3[%c0_8, %c0_9] : memref<16x128xf32, #tpu.memory_space<vmem>>, vector<16x128xf32>
      %14 = arith.subf %12, %13 : vector<16x128xf32>
      %15 = arith.mulf %14, %14 : vector<16x128xf32>
      %cst = arith.constant 9.99999997E-7 : f32
      %16 = vector.broadcast %cst : f32 to vector<16x128xf32>
      %17 = arith.addf %15, %16 : vector<16x128xf32>
      %18 = math.sqrt %17 : vector<16x128xf32>
      %19 = arith.addf %11, %18 : vector<16x128xf32>
      %c0_10 = arith.constant 0 : index
      %c0_11 = arith.constant 0 : index
      %20 = vector.load %arg5[%c0_10, %c0_11] : memref<16x128xf32, #tpu.memory_space<vmem>>, vector<16x128xf32>
      tpu.vector_store %arg5[%c0_10, %c0_11], %19 {strides = array<i32>} : memref<16x128xf32, #tpu.memory_space<vmem>>, vector<16x128xf32>,
    } else {
    }
    %c0_i32_3 = arith.constant 0 : i32
    %8 = arith.cmpi eq, %arg1, %c0_i32_3 : i32
    %9 = arith.extui %8 : i1 to i32
    %c0_i32_4 = arith.constant 0 : i32
    %10 = arith.cmpi ne, %9, %c0_i32_4 : i32
    scf.if %10 {
      %c0 = arith.constant 0 : index
      %c0_5 = arith.constant 0 : index
      %11 = vector.load %arg5[%c0, %c0_5] : memref<16x128xf32, #tpu.memory_space<vmem>>, vector<16x128xf32>
      %12 = vector.shape_cast %11 : vector<16x128xf32> to vector<1x16x128xf32>
      %cst = arith.constant dense<0.000000e+00> : vector<1xf32>
      %13 = vector.multi_reduction <add>, %12, %cst [1, 2] : vector<1x16x128xf32> to vector<1xf32>
      %14 = vector.shape_cast %13 : vector<1xf32> to vector<1x1x1xf32>
      %15 = vector.extract %14[0, 0, 0] : f32 from vector<1x1x1xf32>
      %c0_6 = arith.constant 0 : index
      %c0_7 = arith.constant 0 : index
      %16 = memref.load %arg4[%c0_6, %c0_7] : memref<1x1xf32, #tpu.memory_space<smem>>
      memref.store %15, %arg4[%c0_6, %c0_7] : memref<1x1xf32, #tpu.memory_space<smem>>
    } else {
    }
    return
  }
  func.func @transform_0(%arg0: i32, %arg1: i32) -> (i32, i32) {
    %c1_i32 = arith.constant 1 : i32
    %0 = arith.muli %arg0, %c1_i32 : i32
    %1 = arith.addi %0, %arg1 : i32
    %c0_i32 = arith.constant 0 : i32
    %2 = arith.minsi %1, %c0_i32 : i32
    %c0_i32_0 = arith.constant 0 : i32
    %c0_i32_1 = arith.constant 0 : i32
    return %2, %c0_i32_0 : i32, i32
  }
  func.func @transform_1(%arg0: i32, %arg1: i32) -> (i32, i32) {
    %c1_i32 = arith.constant 1 : i32
    %0 = arith.muli %arg0, %c1_i32 : i32
    %1 = arith.addi %0, %arg1 : i32
    %c0_i32 = arith.constant 0 : i32
    %2 = arith.minsi %1, %c0_i32 : i32
    %c0_i32_0 = arith.constant 0 : i32
    %c0_i32_1 = arith.constant 0 : i32
    return %2, %c0_i32_0 : i32, i32
  }
  func.func @transform_2(%arg0: i32, %arg1: i32) -> (i32, i32) {
    %c0_i32 = arith.constant 0 : i32
    %c0_i32_0 = arith.constant 0 : i32
    return %arg0, %c0_i32 : i32, i32
  }
}

</mosaic_0001>

<llo_original>
// kernel: tpu_custom_call.1
$region0: #{tpu_custom_call.1}
  #allocation0 [shape = 'u32[]', space=smem, size = 0x4, offset = 0x4, fixed_abs, tag = 'smem constant byte address 0x4 - core index']
  #allocation1 [shape = 'u32[72,128]{1,0:T(1,128)}', space=vmem, size = 0x9000, scoped, tag = 'internal scratch']
  #allocation2 [shape = 'f32[16,128]{1,0:T(8,128)}', space=vmem, size = 0x2000, scoped, tag = 'scratch operand']
  %s0 = inlined_call_operand.hbm [shape: f32[16,128], index: 0, kind: input, shape index: {}]
  %s1 = inlined_call_operand.hbm [shape: f32[16,128], index: 1, kind: input, shape index: {}]
  %s2 = inlined_call_operand.hbm [shape: f32[1,1], index: 2, kind: output, shape index: {}]
  %s3 = sld [smem:[#allocation0]]
  $region38: #{tpu_custom_call.1} parent=0
    _
  %s5 = ssub.s32 1, %s3
  %s6 = scalar_select 0, %s5, %s3
  $region1: #{tpu_custom_call.1} parent=0
    #allocation3 [shape = 'u8[8192]{0}', space=vmem, size = 0x2000, scoped, tag = 'input window, operand 0, single buffered']
    #allocation4 [shape = 's32[1]{0}', space=sflag, size = 0x4, scoped, tag = 'scoped memory for tpu_custom_call.1']
    #allocation5 [shape = 's32[1]{0}', space=sflag, size = 0x4, scoped, tag = 'scoped memory for tpu_custom_call.1']
    #allocation6 [shape = 'u8[8192]{0}', space=vmem, size = 0x2000, scoped, tag = 'input window, operand 1, single buffered']
    #allocation7 [shape = 's32[1]{0}', space=sflag, size = 0x4, scoped, tag = 'scoped memory for tpu_custom_call.1']
    #allocation8 [shape = 'u8[512]{0}', space=smem, size = 0x200, scoped, tag = 'output window, operand 0, single buffered']
    %7 = vsyncpa [#allocation4], 0
    %8 = vsyncpa [#allocation7], 0
    %9 = vsyncpa [#allocation5], 0
    // Predicated region
    $region2: #{tpu_custom_call.1} parent=1 // pred_check
      _
    $region3: #{tpu_custom_call.1} parent=1 // pred_check_branch
      %11 = sbr.rel (0) target = $region5
    $region4: #{tpu_custom_call.1} parent=1 // pred_region
      %s12 = sadd.s32 0, 0
      %p13 = scmp.lt.s32.totalorder %s12, 0
      %s14 = scalar_select %p13, %s12, 0
      %s15 = smul.u32 2, %s14
      %17 = vsyncadd [#allocation4], 0
      %s18 = smul.addr %s15, 8
      %s19 = scalar_lea.hbm %s0, %s18
      %s20 = sshll.u32 %s19, 4
      %s21 = int_to_ptr.hbm [resolvable:$true] %s20
      %s22 = sshll.u32 [#allocation3], 4
      %s23 = int_to_ptr.vmem [resolvable:$true] %s22
      %28 = dma.hbm_to_vmem [thread:$0]  %s21, 256, %s23, [#allocation4], 128, 128, 8
    $region5: #{tpu_custom_call.1} parent=1 // pred_fallthru
      _
    // Predicated region
    $region6: #{tpu_custom_call.1} parent=1 // pred_check
      _
    $region7: #{tpu_custom_call.1} parent=1 // pred_check_branch
      %30 = sbr.rel (0) target = $region9
    $region8: #{tpu_custom_call.1} parent=1 // pred_region
      %s31 = sadd.s32 0, 0
      %p32 = scmp.lt.s32.totalorder %s31, 0
      %s33 = scalar_select %p32, %s31, 0
      %s34 = smul.u32 2, %s33
      %36 = vsyncadd [#allocation7], 0
      %s37 = smul.addr %s34, 8
      %s38 = scalar_lea.hbm %s1, %s37
      %s39 = sshll.u32 %s38, 4
      %s40 = int_to_ptr.hbm [resolvable:$true] %s39
      %s41 = sshll.u32 [#allocation6], 4
      %s42 = int_to_ptr.vmem [resolvable:$true] %s41
      %47 = dma.hbm_to_vmem [thread:$0]  %s40, 256, %s42, [#allocation7], 128, 128, 8
    $region9: #{tpu_custom_call.1} parent=1 // pred_fallthru
      _
    // Predicated region
    $region10: #{tpu_custom_call.1} parent=1 // pred_check
      _
    $region11: #{tpu_custom_call.1} parent=1 // pred_check_branch
      %49 = sbr.rel (0) target = $region13
    $region12: #{tpu_custom_call.1} parent=1 // pred_region
      %51 = dma.done [#allocation4], 256
    $region13: #{tpu_custom_call.1} parent=1 // pred_fallthru
      _
    // Predicated region
    $region14: #{tpu_custom_call.1} parent=1 // pred_check
      _
    $region15: #{tpu_custom_call.1} parent=1 // pred_check_branch
      %53 = sbr.rel (0) target = $region17
    $region16: #{tpu_custom_call.1} parent=1 // pred_region
      %55 = dma.done [#allocation7], 256
    $region17: #{tpu_custom_call.1} parent=1 // pred_fallthru
      _
    %s56 = sadd.s32 0, 0
    %p57 = scmp.lt.s32.totalorder %s56, 0
    %s58 = scalar_select %p57, %s56, 0
    %s59 = smul.u32 2, %s58
    %s60 = sadd.s32 0, 0
    %p61 = scmp.lt.s32.totalorder %s60, 0
    %s62 = scalar_select %p61, %s60, 0
    %s63 = smul.u32 2, %s62
    %s64 = sadd.s32 0, 0
    %p65 = scmp.eq.s32.totalorder 0, 0
    // Predicated region
    $region18: #{tpu_custom_call.1} parent=1 // pred_check
      %p66 = pneg %p65
    $region19: #{tpu_custom_call.1} parent=1 // pred_check_branch
      %68 = sbr.rel (%p66) target = $region21
    $region20: #{tpu_custom_call.1} parent=1 // pred_region
      %69 = vst [vmem:[#allocation2] sm:$0xff] 0.0
      %70 = vst [vmem:[#allocation2 + $0x8] sm:$0xff] 0.0
    $region21: #{tpu_custom_call.1} parent=1 // pred_fallthru
      _
    %p71 = scmp.lt.s32.totalorder %s64, 1
    // Predicated region
    $region22: #{tpu_custom_call.1} parent=1 // pred_check
      %p72 = pneg %p71
    $region23: #{tpu_custom_call.1} parent=1 // pred_check_branch
      %74 = sbr.rel (%p72) target = $region25
    $region24: #{tpu_custom_call.1} parent=1 // pred_region
      %v75 = vld [vmem:[#allocation2] sm:$0xff]
      %v76 = vld [vmem:[#allocation2 + $0x8] sm:$0xff]
      %v77 = vld [vmem:[#allocation3] sm:$0xff]
      %v78 = vld [vmem:[#allocation3 + $0x8] sm:$0xff]
      %v79 = vld [vmem:[#allocation6] sm:$0xff]
      %v80 = vld [vmem:[#allocation6 + $0x8] sm:$0xff]
      %v81 = vsub.f32 %v77, %v79
      %v82 = vsub.f32 %v78, %v80
      %v83 = vmul.f32 %v81, %v81
      %v84 = vmul.f32 %v82, %v82
      %v85 = vadd.f32 %v83, 1e-06
      %v86 = vadd.f32 %v84, 1e-06
      %v87 = vrsqrt.pop %v85
      %v88 = vmul.f32 %v87, %v85
      %v89 = vmul.f32 %v88, %v87
      %v90 = vmul.f32 0.5, %v89
      %v91 = vsub.f32 1.5, %v90
      %v92 = vmul.f32 %v87, %v91
      %v93 = vmul.f32 %v85, %v92
      %vm94 = vcmp.eq.f32.partialorder %v85, inf
      %v95 = vsel %vm94, %v85, %v93
      %vm96 = vcmp.eq.f32.partialorder %v85, 0.0
      %v97 = vand.u32 %v85, 2147483648
      %v98 = vsel %vm96, %v97, %v95
      %v99 = vrsqrt.pop %v86
      %v100 = vmul.f32 %v99, %v86
      %v101 = vmul.f32 %v100, %v99
      %v102 = vmul.f32 0.5, %v101
      %v103 = vsub.f32 1.5, %v102
      %v104 = vmul.f32 %v99, %v103
      %v105 = vmul.f32 %v86, %v104
      %vm106 = vcmp.eq.f32.partialorder %v86, inf
      %v107 = vsel %vm106, %v86, %v105
      %vm108 = vcmp.eq.f32.partialorder %v86, 0.0
      %v109 = vand.u32 %v86, 2147483648
      %v110 = vsel %vm108, %v109, %v107
      %v111 = vadd.f32 %v75, %v98
      %v112 = vadd.f32 %v76, %v110
      %113 = vst [vmem:[#allocation2] sm:$0xff] %v111
      %114 = vst [vmem:[#allocation2 + $0x8] sm:$0xff] %v112
    $region25: #{tpu_custom_call.1} parent=1 // pred_fallthru
      _
    // Predicated region
    $region26: #{tpu_custom_call.1} parent=1 // pred_check
      %p115 = pneg %p65
    $region27: #{tpu_custom_call.1} parent=1 // pred_check_branch
      %117 = sbr.rel (%p115) target = $region29
    $region28: #{tpu_custom_call.1} parent=1 // pred_region
      %v118 = vld [vmem:[#allocation2] sm:$0xff]
      %v119 = vld [vmem:[#allocation2 + $0x8] sm:$0xff]
      %v120 = vadd.f32 %v118, %v119
      %121 = vadd.xlane.f32.xlu0 %v120
      %v122 = vpop.xlane.xlu0 %121
      %v123 = vrot.slane %v122, 4
      %v124 = vadd.f32 %v122, %v123
      %v125 = vrot.slane %v124, 2
      %v126 = vadd.f32 %v124, %v125
      %v127 = vrot.slane %v126, 1
      %v128 = vadd.f32 %v126, %v127
      %s129 = vtos %v128
      %s130 = scalar_lea.smem [#allocation8], 0
      %131 = sst [smem:[%s130]] %s129
    $region29: #{tpu_custom_call.1} parent=1 // pred_fallthru
      _
    // Predicated region
    $region30: #{tpu_custom_call.1} parent=1 // pred_check
      _
    $region31: #{tpu_custom_call.1} parent=1 // pred_check_branch
      %133 = sbr.rel (0) target = $region33
    $region32: #{tpu_custom_call.1} parent=1 // pred_region
      %135 = vsyncadd [#allocation5], 0
      %s137 = sshll.u32 %s2, 4
      %s138 = int_to_ptr.hbm [resolvable:$true] %s137
      %140 = dma.smem_to_hbm [#allocation8], 16, %s138, [#allocation5]
    $region33: #{tpu_custom_call.1} parent=1 // pred_fallthru
      _
    // Predicated region
    $region34: #{tpu_custom_call.1} parent=1 // pred_check
      _
    $region35: #{tpu_custom_call.1} parent=1 // pred_check_branch
      %142 = sbr.rel (0) target = $region37
    $region36: #{tpu_custom_call.1} parent=1 // pred_region
      %144 = dma.done [#allocation5], 16
    $region37: #{tpu_custom_call.1} parent=1 // pred_fallthru
      _
    %145 = sfence
    %146 = vsyncpa [#allocation4], 1
    %147 = vsyncpa [#allocation7], 1
    %148 = vsyncpa [#allocation5], 1

</llo_original>
